<compile_context>
chip_gen: v6e
topology: v6e:2x2x1
jax: 0.10.0
libtpu: 0.0.40
codegen_flags: <defaults>
</compile_context>

<pallas_src>
import functools

import jax
import jax.numpy as jnp
from jax.experimental import pallas as pl
from jax.experimental.pallas import tpu as pltpu


def _l2_normalize(x):
    # F.normalize(x, dim=-1): x / max(||x||, 1e-12)  ==  x * rsqrt(max(sumsq, 1e-24))
    sumsq = jnp.sum(x * x, axis=-1, keepdims=True)
    return x * jax.lax.rsqrt(jnp.maximum(sumsq, 1e-24))


def _infonce_kernel(q_ref, pt_ref, pk_ref, nk_ref, out_ref,
                    qn_ref, m_ref, l_ref, *, inv_temp):
    """Grid = (query_blocks, key_blocks); key axis is the softmax reduction axis."""
    kb = pl.program_id(1)

    @pl.when(kb == 0)
    def _init():
        q = q_ref[...].astype(jnp.float32)
        # Fold 1/temperature into the normalized query once: cheaper than scaling
        # both [tq, tk] logit tiles on every key step, and the row-wise target dot
        # then already carries the temperature.
        qn_ref[...] = _l2_normalize(q) * inv_temp
        m_ref[...] = jnp.full(m_ref.shape, -jnp.inf, jnp.float32)
        l_ref[...] = jnp.zeros(l_ref.shape, jnp.float32)

    qn = qn_ref[...]
    pk = _l2_normalize(pk_ref[...].astype(jnp.float32))
    nk = _l2_normalize(nk_ref[...].astype(jnp.float32))

    # Contract the last (embedding) dim of both operands: feeds the MXU straight
    # from the lane-major [rows, E] layout, no explicit key transpose.
    dn = (((1,), (1,)), ((), ()))
    lp = jax.lax.dot_general(qn, pk, dn, preferred_element_type=jnp.float32)
    ln = jax.lax.dot_general(qn, nk, dn, preferred_element_type=jnp.float32)

    # Online softmax over the (virtual) concatenated [pos | neg] columns.
    blk_max = jnp.maximum(jnp.max(lp, axis=-1, keepdims=True),
                          jnp.max(ln, axis=-1, keepdims=True))
    m_new = jnp.maximum(m_ref[...], blk_max)
    alpha = jnp.exp(m_ref[...] - m_new)
    l_ref[...] = alpha * l_ref[...] + (
        jnp.sum(jnp.exp(lp - m_new), axis=-1, keepdims=True)
        + jnp.sum(jnp.exp(ln - m_new), axis=-1, keepdims=True))
    m_ref[...] = m_new

    @pl.when(kb == pl.num_programs(1) - 1)
    def _finalize():
        # Target logit = diag(q @ pos.T) / T = row-wise <qn_scaled, pos_n>.
        pt = _l2_normalize(pt_ref[...].astype(jnp.float32))
        target = jnp.sum(qn * pt, axis=-1, keepdims=True)      # [tq, 1]
        lse = jnp.log(l_ref[...]) + m_ref[...]                  # [tq, 1]
        out_ref[...] = lse - target                             # per-row NLL


def _pick_tile(b, pref=256):
    """Largest convenient row tile: full B if small, else a 256/128/... divisor."""
    if b <= pref:
        return b
    for t in (pref, 128, 64, 32, 16, 8):
        if b % t == 0:
            return t
    return b  # fall back to a single block


def infonce_loss(query, pos, neg, temperature, *, tq=None, tk=None):
    """query, pos, neg: [B, E]. Returns scalar f32 loss (cross_entropy mean)."""
    B, E = query.shape
    tq = tq if tq is not None else _pick_tile(B)
    tk = tk if tk is not None else _pick_tile(B)
    assert B % tq == 0 and B % tk == 0, "tile sizes must divide B"

    kernel = functools.partial(_infonce_kernel, inv_temp=1.0 / float(temperature))

    per_row = pl.pallas_call(
        kernel,
        out_shape=jax.ShapeDtypeStruct((B, 1), jnp.float32),
        grid_spec=pltpu.PrefetchScalarGridSpec(
            num_scalar_prefetch=0,
            grid=(B // tq, B // tk),
            in_specs=[
                pl.BlockSpec((tq, E), lambda qi, kb: (qi, 0)),  # query rows
                pl.BlockSpec((tq, E), lambda qi, kb: (qi, 0)),  # pos rows (target)
                pl.BlockSpec((tk, E), lambda qi, kb: (kb, 0)),  # pos key block
                pl.BlockSpec((tk, E), lambda qi, kb: (kb, 0)),  # neg key block
            ],
            out_specs=pl.BlockSpec((tq, 1), lambda qi, kb: (qi, 0)),
            scratch_shapes=[
                pltpu.VMEM((tq, E), jnp.float32),  # normalized, temp-scaled query
                pltpu.VMEM((tq, 1), jnp.float32),  # running max
                pltpu.VMEM((tq, 1), jnp.float32),  # running sum-exp
            ],
        ),
        compiler_params=pltpu.CompilerParams(
            dimension_semantics=("parallel", "arbitrary")),
    )(query, pos, pos, neg)

    # cross_entropy(..., reduction='mean'); tiny final reduce stays in XLA so the
    # query axis can remain 'parallel' across TensorCores.
    return jnp.sum(per_row) / jnp.float32(B)


def _infonce_ref(query, pos, neg, temperature):
    def l2n(x):
        return x / jnp.maximum(jnp.linalg.norm(x, axis=-1, keepdims=True), 1e-12)

    q, p, n = l2n(query), l2n(pos), l2n(neg)
    logits = jnp.concatenate([q @ p.T, q @ n.T], axis=1) / temperature
    labels = jnp.arange(query.shape[0])
    logp = jax.nn.log_softmax(logits, axis=-1)
    return -jnp.mean(logp[jnp.arange(query.shape[0]), labels])


if __name__ == "__main__":
    temperature = 0.07
    key = jax.random.PRNGKey(0)

    # Test 1: single-block path (B=8, E=32).
    B, E = 8, 32
    kq, kp, kn, key = jax.random.split(key, 4)
    query = jax.random.normal(kq, (B, E), dtype=jnp.float32)
    pos = jax.random.normal(kp, (B, E), dtype=jnp.float32)
    neg = jax.random.normal(kn, (B, E), dtype=jnp.float32)

    loss = infonce_loss(query, pos, neg, temperature)
    jax.block_until_ready(loss)
    ref = _infonce_ref(query, pos, neg, temperature)
    assert jnp.allclose(loss, ref, rtol=1e-5, atol=1e-5), (loss, ref)

    # Test 2: exercise the tiled online-softmax path (grid 2x2).
    B2, E2 = 16, 32
    kq, kp, kn, key = jax.random.split(key, 4)
    q2 = jax.random.normal(kq, (B2, E2), dtype=jnp.float32)
    p2 = jax.random.normal(kp, (B2, E2), dtype=jnp.float32)
    n2 = jax.random.normal(kn, (B2, E2), dtype=jnp.float32)

    loss2 = infonce_loss(q2, p2, n2, temperature, tq=8, tk=8)
    jax.block_until_ready(loss2)
    ref2 = _infonce_ref(q2, p2, n2, temperature)
    assert jnp.allclose(loss2, ref2, rtol=1e-5, atol=1e-5), (loss2, ref2)

    print("KERNEL_OK")
</pallas_src>

<mosaic_0001>
module attributes {stable_mosaic.version = 11 : i64} {
  func.func @_infonce_kernel(%arg0: i32, %arg1: i32, %arg2: memref<8x32xf32, #tpu.memory_space<vmem>>, %arg3: memref<8x32xf32, #tpu.memory_space<vmem>>, %arg4: memref<8x32xf32, #tpu.memory_space<vmem>>, %arg5: memref<8x32xf32, #tpu.memory_space<vmem>>, %arg6: memref<8x1xf32, #tpu.memory_space<vmem>>, %arg7: memref<8x32xf32, #tpu.memory_space<vmem>>, %arg8: memref<8x1xf32, #tpu.memory_space<vmem>>, %arg9: memref<8x1xf32, #tpu.memory_space<vmem>>) attributes {dimension_semantics = [#tpu.dimension_semantics<parallel>, #tpu.dimension_semantics<arbitrary>], iteration_bounds = array<i64: 1, 1>, scalar_prefetch = 0 : i64, scratch_operands = 3 : i64, tpu.core_type = #tpu.core_type<tc>, window_params = [{transform_indices = @transform_0, window_bounds = array<i64: 8, 32>}, {transform_indices = @transform_1, window_bounds = array<i64: 8, 32>}, {transform_indices = @transform_2, window_bounds = array<i64: 8, 32>}, {transform_indices = @transform_3, window_bounds = array<i64: 8, 32>}, {transform_indices = @transform_4, window_bounds = array<i64: 8, 1>}]} {
    %c0_i32 = arith.constant 0 : i32
    %0 = arith.cmpi eq, %arg1, %c0_i32 : i32
    %1 = arith.extui %0 : i1 to i32
    %c0_i32_0 = arith.constant 0 : i32
    %2 = arith.cmpi ne, %1, %c0_i32_0 : i32
    scf.if %2 {
      %c0_27 = arith.constant 0 : index
      %c0_28 = arith.constant 0 : index
      %53 = vector.load %arg2[%c0_27, %c0_28] : memref<8x32xf32, #tpu.memory_space<vmem>>, vector<8x32xf32>
      %54 = arith.mulf %53, %53 : vector<8x32xf32>
      %cst_29 = arith.constant dense<0.000000e+00> : vector<8xf32>
      %55 = vector.multi_reduction <add>, %54, %cst_29 [1] : vector<8x32xf32> to vector<8xf32>
      %56 = vector.shape_cast %55 : vector<8xf32> to vector<8x1xf32>
      %cst_30 = arith.constant 1.000000e-24 : f32
      %57 = vector.broadcast %cst_30 : f32 to vector<8x1xf32>
      %58 = arith.maximumf %56, %57 : vector<8x1xf32>
      %59 = math.rsqrt %58 : vector<8x1xf32>
      %60 = vector.broadcast %59 : vector<8x1xf32> to vector<8x32xf32>
      %61 = arith.mulf %53, %60 : vector<8x32xf32>
      %cst_31 = arith.constant 14.2857141 : f32
      %62 = vector.broadcast %cst_31 : f32 to vector<8x32xf32>
      %63 = arith.mulf %61, %62 : vector<8x32xf32>
      %c0_32 = arith.constant 0 : index
      %c0_33 = arith.constant 0 : index
      %64 = vector.load %arg7[%c0_32, %c0_33] : memref<8x32xf32, #tpu.memory_space<vmem>>, vector<8x32xf32>
      tpu.vector_store %arg7[%c0_32, %c0_33], %63 {strides = array<i32>} : memref<8x32xf32, #tpu.memory_space<vmem>>, vector<8x32xf32>,
      %cst_34 = arith.constant 0xFF800000 : f32
      %65 = vector.broadcast %cst_34 : f32 to vector<8x1xf32>
      %c0_35 = arith.constant 0 : index
      %c0_36 = arith.constant 0 : index
      %66 = vector.load %arg8[%c0_35, %c0_36] : memref<8x1xf32, #tpu.memory_space<vmem>>, vector<8x1xf32>
      tpu.vector_store %arg8[%c0_35, %c0_36], %65 {strides = array<i32>} : memref<8x1xf32, #tpu.memory_space<vmem>>, vector<8x1xf32>,
      %cst_37 = arith.constant 0.000000e+00 : f32
      %67 = vector.broadcast %cst_37 : f32 to vector<8x1xf32>
      %c0_38 = arith.constant 0 : index
      %c0_39 = arith.constant 0 : index
      %68 = vector.load %arg9[%c0_38, %c0_39] : memref<8x1xf32, #tpu.memory_space<vmem>>, vector<8x1xf32>
      tpu.vector_store %arg9[%c0_38, %c0_39], %67 {strides = array<i32>} : memref<8x1xf32, #tpu.memory_space<vmem>>, vector<8x1xf32>,
    } else {
    }
    %c0 = arith.constant 0 : index
    %c0_1 = arith.constant 0 : index
    %3 = vector.load %arg7[%c0, %c0_1] : memref<8x32xf32, #tpu.memory_space<vmem>>, vector<8x32xf32>
    %c0_2 = arith.constant 0 : index
    %c0_3 = arith.constant 0 : index
    %4 = vector.load %arg4[%c0_2, %c0_3] : memref<8x32xf32, #tpu.memory_space<vmem>>, vector<8x32xf32>
    %5 = arith.mulf %4, %4 : vector<8x32xf32>
    %cst = arith.constant dense<0.000000e+00> : vector<8xf32>
    %6 = vector.multi_reduction <add>, %5, %cst [1] : vector<8x32xf32> to vector<8xf32>
    %7 = vector.shape_cast %6 : vector<8xf32> to vector<8x1xf32>
    %cst_4 = arith.constant 1.000000e-24 : f32
    %8 = vector.broadcast %cst_4 : f32 to vector<8x1xf32>
    %9 = arith.maximumf %7, %8 : vector<8x1xf32>
    %10 = math.rsqrt %9 : vector<8x1xf32>
    %11 = vector.broadcast %10 : vector<8x1xf32> to vector<8x32xf32>
    %12 = arith.mulf %4, %11 : vector<8x32xf32>
    %c0_5 = arith.constant 0 : index
    %c0_6 = arith.constant 0 : index
    %13 = vector.load %arg5[%c0_5, %c0_6] : memref<8x32xf32, #tpu.memory_space<vmem>>, vector<8x32xf32>
    %14 = arith.mulf %13, %13 : vector<8x32xf32>
    %cst_7 = arith.constant dense<0.000000e+00> : vector<8xf32>
    %15 = vector.multi_reduction <add>, %14, %cst_7 [1] : vector<8x32xf32> to vector<8xf32>
    %16 = vector.shape_cast %15 : vector<8xf32> to vector<8x1xf32>
    %cst_8 = arith.constant 1.000000e-24 : f32
    %17 = vector.broadcast %cst_8 : f32 to vector<8x1xf32>
    %18 = arith.maximumf %16, %17 : vector<8x1xf32>
    %19 = math.rsqrt %18 : vector<8x1xf32>
    %20 = vector.broadcast %19 : vector<8x1xf32> to vector<8x32xf32>
    %21 = arith.mulf %13, %20 : vector<8x32xf32>
    %cst_9 = arith.constant dense<0.000000e+00> : vector<8x8xf32>
    %22 = tpu.matmul %3, %12, %cst_9 {dimension_numbers = #tpu.dot_dimension_numbers<[1], [1], [0], [0], [0, 0, 1, 0], [], []>} : vector<8x32xf32>, vector<8x32xf32>, vector<8x8xf32> -> vector<8x8xf32>
    %cst_10 = arith.constant dense<0.000000e+00> : vector<8x8xf32>
    %23 = tpu.matmul %3, %21, %cst_10 {dimension_numbers = #tpu.dot_dimension_numbers<[1], [1], [0], [0], [0, 0, 1, 0], [], []>} : vector<8x32xf32>, vector<8x32xf32>, vector<8x8xf32> -> vector<8x8xf32>
    %cst_11 = arith.constant dense<0xFF800000> : vector<8xf32>
    %24 = vector.multi_reduction <maximumf>, %22, %cst_11 [1] : vector<8x8xf32> to vector<8xf32>
    %25 = vector.shape_cast %24 : vector<8xf32> to vector<8x1xf32>
    %cst_12 = arith.constant dense<0xFF800000> : vector<8xf32>
    %26 = vector.multi_reduction <maximumf>, %23, %cst_12 [1] : vector<8x8xf32> to vector<8xf32>
    %27 = vector.shape_cast %26 : vector<8xf32> to vector<8x1xf32>
    %28 = arith.maximumf %25, %27 : vector<8x1xf32>
    %c0_13 = arith.constant 0 : index
    %c0_14 = arith.constant 0 : index
    %29 = vector.load %arg8[%c0_13, %c0_14] : memref<8x1xf32, #tpu.memory_space<vmem>>, vector<8x1xf32>
    %30 = arith.maximumf %29, %28 : vector<8x1xf32>
    %c0_15 = arith.constant 0 : index
    %c0_16 = arith.constant 0 : index
    %31 = vector.load %arg8[%c0_15, %c0_16] : memref<8x1xf32, #tpu.memory_space<vmem>>, vector<8x1xf32>
    %32 = arith.subf %31, %30 : vector<8x1xf32>
    %33 = math.exp %32 : vector<8x1xf32>
    %c0_17 = arith.constant 0 : index
    %c0_18 = arith.constant 0 : index
    %34 = vector.load %arg9[%c0_17, %c0_18] : memref<8x1xf32, #tpu.memory_space<vmem>>, vector<8x1xf32>
    %35 = arith.mulf %33, %34 : vector<8x1xf32>
    %36 = vector.broadcast %30 : vector<8x1xf32> to vector<8x8xf32>
    %37 = arith.subf %22, %36 : vector<8x8xf32>
    %38 = math.exp %37 : vector<8x8xf32>
    %cst_19 = arith.constant dense<0.000000e+00> : vector<8xf32>
    %39 = vector.multi_reduction <add>, %38, %cst_19 [1] : vector<8x8xf32> to vector<8xf32>
    %40 = vector.shape_cast %39 : vector<8xf32> to vector<8x1xf32>
    %41 = vector.broadcast %30 : vector<8x1xf32> to vector<8x8xf32>
    %42 = arith.subf %23, %41 : vector<8x8xf32>
    %43 = math.exp %42 : vector<8x8xf32>
    %cst_20 = arith.constant dense<0.000000e+00> : vector<8xf32>
    %44 = vector.multi_reduction <add>, %43, %cst_20 [1] : vector<8x8xf32> to vector<8xf32>
    %45 = vector.shape_cast %44 : vector<8xf32> to vector<8x1xf32>
    %46 = arith.addf %40, %45 : vector<8x1xf32>
    %47 = arith.addf %35, %46 : vector<8x1xf32>
    %c0_21 = arith.constant 0 : index
    %c0_22 = arith.constant 0 : index
    %48 = vector.load %arg9[%c0_21, %c0_22] : memref<8x1xf32, #tpu.memory_space<vmem>>, vector<8x1xf32>
    tpu.vector_store %arg9[%c0_21, %c0_22], %47 {strides = array<i32>} : memref<8x1xf32, #tpu.memory_space<vmem>>, vector<8x1xf32>,
    %c0_23 = arith.constant 0 : index
    %c0_24 = arith.constant 0 : index
    %49 = vector.load %arg8[%c0_23, %c0_24] : memref<8x1xf32, #tpu.memory_space<vmem>>, vector<8x1xf32>
    tpu.vector_store %arg8[%c0_23, %c0_24], %30 {strides = array<i32>} : memref<8x1xf32, #tpu.memory_space<vmem>>, vector<8x1xf32>,
    %c0_i32_25 = arith.constant 0 : i32
    %50 = arith.cmpi eq, %arg1, %c0_i32_25 : i32
    %51 = arith.extui %50 : i1 to i32
    %c0_i32_26 = arith.constant 0 : i32
    %52 = arith.cmpi ne, %51, %c0_i32_26 : i32
    scf.if %52 {
      %c0_27 = arith.constant 0 : index
      %c0_28 = arith.constant 0 : index
      %53 = vector.load %arg3[%c0_27, %c0_28] : memref<8x32xf32, #tpu.memory_space<vmem>>, vector<8x32xf32>
      %54 = arith.mulf %53, %53 : vector<8x32xf32>
      %cst_29 = arith.constant dense<0.000000e+00> : vector<8xf32>
      %55 = vector.multi_reduction <add>, %54, %cst_29 [1] : vector<8x32xf32> to vector<8xf32>
      %56 = vector.shape_cast %55 : vector<8xf32> to vector<8x1xf32>
      %cst_30 = arith.constant 1.000000e-24 : f32
      %57 = vector.broadcast %cst_30 : f32 to vector<8x1xf32>
      %58 = arith.maximumf %56, %57 : vector<8x1xf32>
      %59 = math.rsqrt %58 : vector<8x1xf32>
      %60 = vector.broadcast %59 : vector<8x1xf32> to vector<8x32xf32>
      %61 = arith.mulf %53, %60 : vector<8x32xf32>
      %62 = arith.mulf %3, %61 : vector<8x32xf32>
      %cst_31 = arith.constant dense<0.000000e+00> : vector<8xf32>
      %63 = vector.multi_reduction <add>, %62, %cst_31 [1] : vector<8x32xf32> to vector<8xf32>
      %64 = vector.shape_cast %63 : vector<8xf32> to vector<8x1xf32>
      %c0_32 = arith.constant 0 : index
      %c0_33 = arith.constant 0 : index
      %65 = vector.load %arg9[%c0_32, %c0_33] : memref<8x1xf32, #tpu.memory_space<vmem>>, vector<8x1xf32>
      %66 = math.log %65 : vector<8x1xf32>
      %c0_34 = arith.constant 0 : index
      %c0_35 = arith.constant 0 : index
      %67 = vector.load %arg8[%c0_34, %c0_35] : memref<8x1xf32, #tpu.memory_space<vmem>>, vector<8x1xf32>
      %68 = arith.addf %66, %67 : vector<8x1xf32>
      %69 = arith.subf %68, %64 : vector<8x1xf32>
      %c0_36 = arith.constant 0 : index
      %c0_37 = arith.constant 0 : index
      %70 = vector.load %arg6[%c0_36, %c0_37] : memref<8x1xf32, #tpu.memory_space<vmem>>, vector<8x1xf32>
      tpu.vector_store %arg6[%c0_36, %c0_37], %69 {strides = array<i32>} : memref<8x1xf32, #tpu.memory_space<vmem>>, vector<8x1xf32>,
    } else {
    }
    return
  }
  func.func @transform_0(%arg0: i32, %arg1: i32) -> (i32, i32) {
    %c0_i32 = arith.constant 0 : i32
    %c0_i32_0 = arith.constant 0 : i32
    return %arg0, %c0_i32 : i32, i32
  }
  func.func @transform_1(%arg0: i32, %arg1: i32) -> (i32, i32) {
    %c0_i32 = arith.constant 0 : i32
    %c0_i32_0 = arith.constant 0 : i32
    return %arg0, %c0_i32 : i32, i32
  }
  func.func @transform_2(%arg0: i32, %arg1: i32) -> (i32, i32) {
    %c0_i32 = arith.constant 0 : i32
    %c0_i32_0 = arith.constant 0 : i32
    return %arg1, %c0_i32 : i32, i32
  }
  func.func @transform_3(%arg0: i32, %arg1: i32) -> (i32, i32) {
    %c0_i32 = arith.constant 0 : i32
    %c0_i32_0 = arith.constant 0 : i32
    return %arg1, %c0_i32 : i32, i32
  }
  func.func @transform_4(%arg0: i32, %arg1: i32) -> (i32, i32) {
    %c0_i32 = arith.constant 0 : i32
    %c0_i32_0 = arith.constant 0 : i32
    return %arg0, %c0_i32 : i32, i32
  }
}

</mosaic_0001>

<llo_original>
// kernel: tpu_custom_call.1
$region0: #{tpu_custom_call.1}
  #allocation0 [shape = 'u32[]', space=smem, size = 0x4, offset = 0x4, fixed_abs, tag = 'smem constant byte address 0x4 - core index']
  #allocation1 [shape = 'u32[144,128]{1,0:T(1,128)}', space=vmem, size = 0x12000, scoped, tag = 'internal scratch']
  #allocation2 [shape = 'f32[8,32]{1,0:T(8,128)}', space=vmem, size = 0x1000, scoped, tag = 'scratch operand']
  #allocation3 [shape = 'f32[8,1]{1,0:T(8,128)}', space=vmem, size = 0x1000, scoped, tag = 'scratch operand']
  #allocation4 [shape = 'f32[8,1]{1,0:T(8,128)}', space=vmem, size = 0x1000, scoped, tag = 'scratch operand']
  %s0 = inlined_call_operand.hbm [shape: f32[8,32], index: 0, kind: input, shape index: {}]
  %s1 = inlined_call_operand.hbm [shape: f32[8,32], index: 1, kind: input, shape index: {}]
  %s2 = inlined_call_operand.hbm [shape: f32[8,32], index: 2, kind: input, shape index: {}]
  %s3 = inlined_call_operand.hbm [shape: f32[8,32], index: 3, kind: input, shape index: {}]
  %s4 = inlined_call_operand.vmem [shape: f32[8,1], index: 4, kind: output, shape index: {}]
  %s5 = sld [smem:[#allocation0]]
  $region50: #{tpu_custom_call.1} parent=0
    _
  %s7 = ssub.s32 1, %s5
  %s8 = scalar_select 0, %s7, %s5
  $region1: #{tpu_custom_call.1} parent=0
    #allocation5 [shape = 'u8[4096]{0}', space=vmem, size = 0x1000, scoped, tag = 'input window, operand 0, single buffered']
    #allocation6 [shape = 's32[1]{0}', space=sflag, size = 0x4, scoped, tag = 'scoped memory for tpu_custom_call.1']
    #allocation7 [shape = 'u8[4096]{0}', space=vmem, size = 0x1000, scoped, tag = 'input window, operand 1, single buffered']
    #allocation8 [shape = 's32[1]{0}', space=sflag, size = 0x4, scoped, tag = 'scoped memory for tpu_custom_call.1']
    #allocation9 [shape = 'u8[4096]{0}', space=vmem, size = 0x1000, scoped, tag = 'input window, operand 2, single buffered']
    #allocation10 [shape = 'u8[4096]{0}', space=vmem, size = 0x1000, scoped, tag = 'input window, operand 3, single buffered']
    #allocation11 [shape = 's32[1]{0}', space=sflag, size = 0x4, scoped, tag = 'scoped memory for tpu_custom_call.1']
    %9 = vsyncpa [#allocation6], 0
    %10 = vsyncpa [#allocation8], 0
    %11 = vsyncpa [#allocation11], 0
    // Predicated region
    $region2: #{tpu_custom_call.1} parent=1 // pred_check
      _
    $region3: #{tpu_custom_call.1} parent=1 // pred_check_branch
      %13 = sbr.rel (0) target = $region5
    $region4: #{tpu_custom_call.1} parent=1 // pred_region
      %s15 = ssub.s32 128, 128
      %16 = vsyncadd [#allocation6], %s15
      %s18 = sshll.u32 [#allocation5], 4
      %s19 = int_to_ptr.vmem [resolvable:$true] %s18
      %21 = dma.hbm_to_vmem [thread:$0]  %s0, 128, %s19, [#allocation6]
    $region5: #{tpu_custom_call.1} parent=1 // pred_fallthru
      _
    // Predicated region
    $region6: #{tpu_custom_call.1} parent=1 // pred_check
      _
    $region7: #{tpu_custom_call.1} parent=1 // pred_check_branch
      %23 = sbr.rel (0) target = $region9
    $region8: #{tpu_custom_call.1} parent=1 // pred_region
      %s25 = ssub.s32 128, 128
      %26 = vsyncadd [#allocation8], %s25
      %s28 = sshll.u32 [#allocation7], 4
      %s29 = int_to_ptr.vmem [resolvable:$true] %s28
      %31 = dma.hbm_to_vmem [thread:$0]  %s1, 128, %s29, [#allocation8]
    $region9: #{tpu_custom_call.1} parent=1 // pred_fallthru
      _
    // Predicated region
    $region10: #{tpu_custom_call.1} parent=1 // pred_check
      _
    $region11: #{tpu_custom_call.1} parent=1 // pred_check_branch
      %33 = sbr.rel (0) target = $region13
    $region12: #{tpu_custom_call.1} parent=1 // pred_region
      %s35 = ssub.s32 128, 128
      %36 = vsyncadd [#allocation8], %s35
      %s38 = sshll.u32 [#allocation9], 4
      %s39 = int_to_ptr.vmem [resolvable:$true] %s38
      %41 = dma.hbm_to_vmem [thread:$0]  %s2, 128, %s39, [#allocation8]
    $region13: #{tpu_custom_call.1} parent=1 // pred_fallthru
      _
    // Predicated region
    $region14: #{tpu_custom_call.1} parent=1 // pred_check
      _
    $region15: #{tpu_custom_call.1} parent=1 // pred_check_branch
      %43 = sbr.rel (0) target = $region17
    $region16: #{tpu_custom_call.1} parent=1 // pred_region
      %s45 = ssub.s32 128, 128
      %46 = vsyncadd [#allocation11], %s45
      %s48 = sshll.u32 [#allocation10], 4
      %s49 = int_to_ptr.vmem [resolvable:$true] %s48
      %51 = dma.hbm_to_vmem [thread:$0]  %s3, 128, %s49, [#allocation11]
    $region17: #{tpu_custom_call.1} parent=1 // pred_fallthru
      _
    // Predicated region
    $region18: #{tpu_custom_call.1} parent=1 // pred_check
      _
    $region19: #{tpu_custom_call.1} parent=1 // pred_check_branch
      %53 = sbr.rel (0) target = $region21
    $region20: #{tpu_custom_call.1} parent=1 // pred_region
      %54 = dma.done [#allocation6], 128
    $region21: #{tpu_custom_call.1} parent=1 // pred_fallthru
      _
    // Predicated region
    $region22: #{tpu_custom_call.1} parent=1 // pred_check
      _
    $region23: #{tpu_custom_call.1} parent=1 // pred_check_branch
      %56 = sbr.rel (0) target = $region25
    $region24: #{tpu_custom_call.1} parent=1 // pred_region
      %57 = dma.done [#allocation8], 128
    $region25: #{tpu_custom_call.1} parent=1 // pred_fallthru
      _
    // Predicated region
    $region26: #{tpu_custom_call.1} parent=1 // pred_check
      _
    $region27: #{tpu_custom_call.1} parent=1 // pred_check_branch
      %59 = sbr.rel (0) target = $region29
    $region28: #{tpu_custom_call.1} parent=1 // pred_region
      %60 = dma.done [#allocation8], 128
    $region29: #{tpu_custom_call.1} parent=1 // pred_fallthru
      _
    // Predicated region
    $region30: #{tpu_custom_call.1} parent=1 // pred_check
      _
    $region31: #{tpu_custom_call.1} parent=1 // pred_check_branch
      %62 = sbr.rel (0) target = $region33
    $region32: #{tpu_custom_call.1} parent=1 // pred_region
      %63 = dma.done [#allocation11], 128
    $region33: #{tpu_custom_call.1} parent=1 // pred_fallthru
      _
    %p64 = scmp.eq.s32.totalorder 0, 0
    // Predicated region
    $region34: #{tpu_custom_call.1} parent=1 // pred_check
      %p65 = pneg %p64
    $region35: #{tpu_custom_call.1} parent=1 // pred_check_branch
      %67 = sbr.rel (%p65) target = $region37
    $region36: #{tpu_custom_call.1} parent=1 // pred_region
      %v68 = vld [vmem:[#allocation5] sm:$0xff]
      %v69 = vmul.f32 %v68, %v68
      %vm70 = vcmask 261120
      %v71 = vsel %vm70, %v69, 0.0
      %72 = vadd.xlane.f32.xlu0 %v71
      %v73 = vpop.xlane.xlu0 %72
      %v74 = vmax.f32 %v73, 1e-24
      %v75 = vrsqrt.pop %v74
      %v76 = vmul.f32 %v68, %v75
      %v77 = vmul.f32 %v76, 14.285714
      %78 = vst.msk [vmem:[#allocation2] sm:$0xff] %vm70, %v77
      %vm79 = vcmask 7168
      %80 = vst.msk [vmem:[#allocation3] sm:$0xff] %vm79, -inf
      %81 = vst.msk [vmem:[#allocation4] sm:$0xff] %vm79, 0.0
    $region37: #{tpu_custom_call.1} parent=1 // pred_fallthru
      _
    %v82 = vld [vmem:[#allocation2] sm:$0xff]
    %v83 = vld [vmem:[#allocation9] sm:$0xff]
    %v84 = vmul.f32 %v83, %v83
    %vm85 = vcmask 261120
    %v86 = vsel %vm85, %v84, 0.0
    %87 = vadd.xlane.f32.xlu0 %v86
    %v88 = vpop.xlane.xlu0 %87
    %v89 = vmax.f32 %v88, 1e-24
    %v90 = vrsqrt.pop %v89
    %v91 = vmul.f32 %v83, %v90
    %v92 = vld [vmem:[#allocation10] sm:$0xff]
    %v93 = vmul.f32 %v92, %v92
    %v94 = vsel %vm85, %v93, 0.0
    %95 = vadd.xlane.f32.xlu0 %v94
    %v96 = vpop.xlane.xlu0 %95
    %v97 = vmax.f32 %v96, 1e-24
    %v98 = vrsqrt.pop %v97
    %v99 = vmul.f32 %v92, %v98
    %v101 = vsel %vm85, %v82, 0
    %v104 = vsel %vm85, %v91, 0
    %106 = vmatprep.subr.mxu0 0.0
    %107 = vmatpush1.xpose.msra.mxu0 0.0
    %108 = vmatprep.subr.mxu0 0.0
    %109 = vmatpush1.xpose.msra.mxu0 0.0
    %110 = vmatprep.subr.mxu0 0.0
    %111 = vmatpush1.xpose.msra.mxu0 0.0
    %112 = vmatprep.subr.mxu0 0.0
    %113 = vmatpush1.xpose.msra.mxu0 0.0
    %114 = vmatprep.subr.mxu0 0.0
    %115 = vmatpush1.xpose.msra.mxu0 0.0
    %116 = vmatprep.subr.mxu0 0.0
    %117 = vmatpush1.xpose.msra.mxu0 0.0
    %118 = vmatprep.subr.mxu0 0.0
    %119 = vmatpush1.xpose.msra.mxu0 0.0
    %120 = vmatprep.subr.mxu0 0.0
    %121 = vmatpush1.xpose.msra.mxu0 0.0
    %122 = vmatprep.subr.mxu0 0.0
    %123 = vmatpush1.xpose.msra.mxu0 0.0
    %124 = vmatprep.subr.mxu0 0.0
    %125 = vmatpush1.xpose.msra.mxu0 0.0
    %126 = vmatprep.subr.mxu0 0.0
    %127 = vmatpush1.xpose.msra.mxu0 0.0
    %128 = vmatprep.subr.mxu0 0.0
    %129 = vmatpush1.xpose.msra.mxu0 0.0
    %130 = vmatprep.subr.mxu0 0.0
    %131 = vmatpush1.xpose.msra.mxu0 0.0
    %132 = vmatprep.subr.mxu0 0.0
    %133 = vmatpush1.xpose.msra.mxu0 0.0
    %134 = vmatprep.subr.mxu0 0.0
    %135 = vmatpush1.xpose.msra.mxu0 0.0
    %136 = vmatprep.subr.mxu0 0.0
    %137 = vmatpush1.xpose.msra.mxu0 %v104
    %138 = vmatprep.subr.mxu0 0.0
    %139 = vmatpush2.xpose.msra.mxu0 0.0
    %140 = vmatprep.subr.mxu0 0.0
    %141 = vmatpush2.xpose.msra.mxu0 0.0
    %142 = vmatprep.subr.mxu0 0.0
    %143 = vmatpush2.xpose.msra.mxu0 0.0
    %144 = vmatprep.subr.mxu0 0.0
    %145 = vmatpush2.xpose.msra.mxu0 0.0
    %146 = vmatprep.subr.mxu0 0.0
    %147 = vmatpush2.xpose.msra.mxu0 0.0
    %148 = vmatprep.subr.mxu0 0.0
    %149 = vmatpush2.xpose.msra.mxu0 0.0
    %150 = vmatprep.subr.mxu0 0.0
    %151 = vmatpush2.xpose.msra.mxu0 0.0
    %152 = vmatprep.subr.mxu0 0.0
    %153 = vmatpush2.xpose.msra.mxu0 0.0
    %154 = vmatprep.subr.mxu0 0.0
    %155 = vmatpush2.xpose.msra.mxu0 0.0
    %156 = vmatprep.subr.mxu0 0.0
    %157 = vmatpush2.xpose.msra.mxu0 0.0
    %158 = vmatprep.subr.mxu0 0.0
    %159 = vmatpush2.xpose.msra.mxu0 0.0
    %160 = vmatprep.subr.mxu0 0.0
    %161 = vmatpush2.xpose.msra.mxu0 0.0
    %162 = vmatprep.subr.mxu0 0.0
    %163 = vmatpush2.xpose.msra.mxu0 0.0
    %164 = vmatprep.subr.mxu0 0.0
    %165 = vmatpush2.xpose.msra.mxu0 0.0
    %166 = vmatprep.subr.mxu0 0.0
    %167 = vmatpush2.xpose.msra.mxu0 0.0
    %168 = vmatprep.subr.mxu0 0.0
    %169 = vmatpush2.xpose.msra.mxu0 0.0
    %170 = vmatprep.mubr.f32.mxu0 0.0
    %171 = vmatmul.mubr.f32.gmra.mxu0 %v101
    %v172 = vpop.f32.mrf.mxu0
    %v173 = vadd.f32 0.0, %v172
    %v174 = vpop.f32.mrf.mxu0
    %175 = vdwg.mxu0
    %v177 = vsel %vm85, %v99, 0
    %179 = vmatprep.subr.mxu0 0.0
    %180 = vmatpush1.xpose.msra.mxu0 0.0
    %181 = vmatprep.subr.mxu0 0.0
    %182 = vmatpush1.xpose.msra.mxu0 0.0
    %183 = vmatprep.subr.mxu0 0.0
    %184 = vmatpush1.xpose.msra.mxu0 0.0
    %185 = vmatprep.subr.mxu0 0.0
    %186 = vmatpush1.xpose.msra.mxu0 0.0
    %187 = vmatprep.subr.mxu0 0.0
    %188 = vmatpush1.xpose.msra.mxu0 0.0
    %189 = vmatprep.subr.mxu0 0.0
    %190 = vmatpush1.xpose.msra.mxu0 0.0
    %191 = vmatprep.subr.mxu0 0.0
    %192 = vmatpush1.xpose.msra.mxu0 0.0
    %193 = vmatprep.subr.mxu0 0.0
    %194 = vmatpush1.xpose.msra.mxu0 0.0
    %195 = vmatprep.subr.mxu0 0.0
    %196 = vmatpush1.xpose.msra.mxu0 0.0
    %197 = vmatprep.subr.mxu0 0.0
    %198 = vmatpush1.xpose.msra.mxu0 0.0
    %199 = vmatprep.subr.mxu0 0.0
    %200 = vmatpush1.xpose.msra.mxu0 0.0
    %201 = vmatprep.subr.mxu0 0.0
    %202 = vmatpush1.xpose.msra.mxu0 0.0
    %203 = vmatprep.subr.mxu0 0.0
    %204 = vmatpush1.xpose.msra.mxu0 0.0
    %205 = vmatprep.subr.mxu0 0.0
    %206 = vmatpush1.xpose.msra.mxu0 0.0
    %207 = vmatprep.subr.mxu0 0.0
    %208 = vmatpush1.xpose.msra.mxu0 0.0
    %209 = vmatprep.subr.mxu0 0.0
    %210 = vmatpush1.xpose.msra.mxu0 %v177
    %211 = vmatprep.subr.mxu0 0.0
    %212 = vmatpush2.xpose.msra.mxu0 0.0
    %213 = vmatprep.subr.mxu0 0.0
    %214 = vmatpush2.xpose.msra.mxu0 0.0
    %215 = vmatprep.subr.mxu0 0.0
    %216 = vmatpush2.xpose.msra.mxu0 0.0
    %217 = vmatprep.subr.mxu0 0.0
    %218 = vmatpush2.xpose.msra.mxu0 0.0
    %219 = vmatprep.subr.mxu0 0.0
    %220 = vmatpush2.xpose.msra.mxu0 0.0
    %221 = vmatprep.subr.mxu0 0.0
    %222 = vmatpush2.xpose.msra.mxu0 0.0
    %223 = vmatprep.subr.mxu0 0.0
    %224 = vmatpush2.xpose.msra.mxu0 0.0
    %225 = vmatprep.subr.mxu0 0.0
    %226 = vmatpush2.xpose.msra.mxu0 0.0
    %227 = vmatprep.subr.mxu0 0.0
    %228 = vmatpush2.xpose.msra.mxu0 0.0
    %229 = vmatprep.subr.mxu0 0.0
    %230 = vmatpush2.xpose.msra.mxu0 0.0
    %231 = vmatprep.subr.mxu0 0.0
    %232 = vmatpush2.xpose.msra.mxu0 0.0
    %233 = vmatprep.subr.mxu0 0.0
    %234 = vmatpush2.xpose.msra.mxu0 0.0
    %235 = vmatprep.subr.mxu0 0.0
    %236 = vmatpush2.xpose.msra.mxu0 0.0
    %237 = vmatprep.subr.mxu0 0.0
    %238 = vmatpush2.xpose.msra.mxu0 0.0
    %239 = vmatprep.subr.mxu0 0.0
    %240 = vmatpush2.xpose.msra.mxu0 0.0
    %241 = vmatprep.subr.mxu0 0.0
    %242 = vmatpush2.xpose.msra.mxu0 0.0
    %243 = vmatprep.mubr.f32.mxu0 0.0
    %244 = vmatmul.mubr.f32.gmra.mxu0 %v101
    %v245 = vpop.f32.mrf.mxu0
    %v246 = vadd.f32 0.0, %v245
    %v247 = vpop.f32.mrf.mxu0
    %248 = vdwg.mxu0
    %vm249 = vcmask 64512
    %v250 = vsel %vm249, %v173, -inf
    %251 = vmax.xlane.f32.xlu0 %v250
    %v252 = vpop.xlane.xlu0 %251
    %v253 = vsel %vm249, %v246, -inf
    %254 = vmax.xlane.f32.xlu0 %v253
    %v255 = vpop.xlane.xlu0 %254
    %v256 = vmax.f32 %v252, %v255
    %v257 = vld [vmem:[#allocation3] sm:$0xff]
    %v258 = vmax.f32 %v257, %v256
    %v259 = vsub.f32 %v257, %v258
    %v260 = vmul.f32 %v259, 1.442695
    %v261 = vpow.pop %v260
    %v262 = vld [vmem:[#allocation4] sm:$0xff]
    %v263 = vmul.f32 %v261, %v262
    %265 = vset.pattern.permute.xlu0 0
    %266 = vperm.xlu0 %265, %v258
    %v267 = vpop.permute.xlu0 %266
    %v269 = vsub.f32 %v173, %v267
    %v270 = vmul.f32 %v269, 1.442695
    %v271 = vpow.pop %v270
    %v272 = vsel %vm249, %v271, 0.0
    %273 = vadd.xlane.f32.xlu0 %v272
    %v274 = vpop.xlane.xlu0 %273
    %v275 = vsub.f32 %v246, %v267
    %v276 = vmul.f32 %v275, 1.442695
    %v277 = vpow.pop %v276
    %v278 = vsel %vm249, %v277, 0.0
    %279 = vadd.xlane.f32.xlu0 %v278
    %v280 = vpop.xlane.xlu0 %279
    %v281 = vadd.f32 %v274, %v280
    %v282 = vadd.f32 %v263, %v281
    %vm283 = vcmask 7168
    %284 = vst.msk [vmem:[#allocation4] sm:$0xff] %vm283, %v282
    %285 = vst.msk [vmem:[#allocation3] sm:$0xff] %vm283, %v258
    // Predicated region
    $region38: #{tpu_custom_call.1} parent=1 // pred_check
      %p286 = pneg %p64
    $region39: #{tpu_custom_call.1} parent=1 // pred_check_branch
      %288 = sbr.rel (%p286) target = $region41
    $region40: #{tpu_custom_call.1} parent=1 // pred_region
      %v289 = vld [vmem:[#allocation7] sm:$0xff]
      %v290 = vmul.f32 %v289, %v289
      %v291 = vsel %vm85, %v290, 0.0
      %292 = vadd.xlane.f32.xlu0 %v291
      %v293 = vpop.xlane.xlu0 %292
      %v294 = vmax.f32 %v293, 1e-24
      %v295 = vrsqrt.pop %v294
      %v296 = vmul.f32 %v289, %v295
      %v297 = vmul.f32 %v82, %v296
      %v298 = vsel %vm85, %v297, 0.0
      %299 = vadd.xlane.f32.xlu0 %v298
      %v300 = vpop.xlane.xlu0 %299
      %v301 = vld [vmem:[#allocation4] sm:$0xff]
      %v302 = vlog2.pop %v301
      %v303 = vmul.f32 %v302, 0.6931472
      %v304 = vld [vmem:[#allocation3] sm:$0xff]
      %v305 = vadd.f32 %v303, %v304
      %v306 = vsub.f32 %v305, %v300
      %307 = vst.msk [vmem:[%s4] sm:$0xff] %vm283, %v306
    $region41: #{tpu_custom_call.1} parent=1 // pred_fallthru
      _
    // Predicated region
    $region42: #{tpu_custom_call.1} parent=1 // pred_check
      _
    $region43: #{tpu_custom_call.1} parent=1 // pred_check_branch
      %309 = sbr.rel (0) target = $region45
    $region44: #{tpu_custom_call.1} parent=1 // pred_region
      _
    $region45: #{tpu_custom_call.1} parent=1 // pred_fallthru
      _
    // Predicated region
    $region46: #{tpu_custom_call.1} parent=1 // pred_check
      _
    $region47: #{tpu_custom_call.1} parent=1 // pred_check_branch
      %311 = sbr.rel (0) target = $region49
    $region48: #{tpu_custom_call.1} parent=1 // pred_region
      _
    $region49: #{tpu_custom_call.1} parent=1 // pred_fallthru
      _
    %312 = vsyncpa [#allocation6], 1
    %313 = vsyncpa [#allocation8], 1
    %314 = vsyncpa [#allocation11], 1

</llo_original>
